<compile_context>
chip_gen: v5e
topology: v5e:2x2
jax: 0.10.0
libtpu: 0.0.40
codegen_flags: <defaults>
</compile_context>

<pallas_src>
import jax
import jax.numpy as jnp
from jax import lax
from jax.experimental import pallas as pl
from jax.experimental.pallas import tpu as pltpu

_MIB = 1024 * 1024


def _round_up(x: int, m: int) -> int:
    return (x + m - 1) // m * m


def _vmem_capacity_bytes() -> int:
    try:
        return int(pltpu.get_tpu_info().vmem_capacity_bytes)
    except Exception:
        return 64 * _MIB  # conservative (v7x-sized) fallback


def _working_set_bytes(tm, tn, tk, k_grid, in_item, out_item):
    # Double-buffered x, W, bias, out blocks (+ f32 accumulator if K is tiled).
    est = 2 * (tm * tk + tn * tk) * in_item
    est += 2 * 8 * tn * 4            # (1, tn) bias block pads to 8 sublanes
    est += 2 * tm * tn * out_item
    if k_grid > 1:
        est += tm * tn * 4
    return est


def _plan_tiles(output_dim, input_dim, in_item, budget, tm_cap, tn_target, max_tk):
    n128 = _round_up(output_dim, 128)
    k128 = _round_up(input_dim, 128)

    tn = max(128, min(tn_target, n128))
    # Keep >= 2 N blocks where possible: N is a "parallel" grid axis, so both
    # v7x TensorCores get work even when the M grid collapses to 1.
    if n128 >= 2 * 128:
        tn = min(tn, _round_up(n128 // 2, 128))

    # Prefer collapsing the whole K reduction into one grid step.
    tk = k128 if max_tk is None else min(k128, _round_up(max_tk, 128))

    def fits(tn_, tk_):
        k_grid = _round_up(input_dim, tk_) // tk_
        return _working_set_bytes(tm_cap, tn_, tk_, k_grid, in_item, 4) <= budget

    while not fits(tn, tk) and tk > 128:
        tk = max(128, _round_up(tk // 2, 128))
    while not fits(tn, tk) and tn > 128:
        tn = max(128, _round_up(tn // 2, 128))
    return tn, tk


def _linear_kernel_single_k(x_ref, w_ref, b_ref, o_ref):
    """K grid == 1: one dot per output tile, bias epilogue, no accumulator."""
    acc = lax.dot_general(
        x_ref[...], w_ref[...],
        dimension_numbers=(((1,), (1,)), ((), ())),   # x @ W^T (torch layout)
        preferred_element_type=jnp.float32,
    )
    o_ref[...] = (acc + b_ref[...]).astype(o_ref.dtype)


def _linear_kernel_multi_k(x_ref, w_ref, b_ref, o_ref, acc_ref):
    """K grid > 1: f32 VMEM accumulator, init/finalize gated with pl.when."""
    k = pl.program_id(2)

    @pl.when(k == 0)
    def _init():
        acc_ref[...] = jnp.zeros_like(acc_ref)

    acc_ref[...] += lax.dot_general(
        x_ref[...], w_ref[...],
        dimension_numbers=(((1,), (1,)), ((), ())),
        preferred_element_type=jnp.float32,
    )

    @pl.when(k == pl.num_programs(2) - 1)
    def _finalize():
        o_ref[...] = (acc_ref[...] + b_ref[...]).astype(o_ref.dtype)


def make_linear(weight, bias, *, compute_dtype=None, tn_target=512,
                tm_cap=1024, max_tk=None):
    """Build a forward fn equivalent to torch.nn.Linear(input_dim, output_dim).

    weight: (output_dim, input_dim)  -- torch convention, NOT transposed
    bias:   (output_dim,)
    compute_dtype: MXU streaming dtype for x/W (e.g. jnp.bfloat16 halves the
                   weight HBM traffic); accumulation and bias stay float32.

    Weight/bias pad + cast happens ONCE here; each forward only pads x.
    """
    output_dim, input_dim = weight.shape
    cdt = jnp.dtype(weight.dtype if compute_dtype is None else compute_dtype)
    in_item = cdt.itemsize

    vmem_cap = _vmem_capacity_bytes()
    budget = (vmem_cap * 3) // 4  # leave pipelining / internal-scratch headroom
    # vmem_limit cap: ~100 MiB on 128-MiB parts (v5e/v6e), ~52 MiB on v7x.
    limit_cap = 100 * _MIB if vmem_cap >= 96 * _MIB else 52 * _MIB

    tn, tk = _plan_tiles(output_dim, input_dim, in_item, budget, tm_cap,
                         tn_target, max_tk)
    n_pad = _round_up(output_dim, tn)
    k_pad = _round_up(input_dim, tk)
    n_grid = n_pad // tn
    k_grid = k_pad // tk

    # One-time weight/bias pad + cast (stays resident in the compute dtype).
    wp = jnp.pad(weight, ((0, n_pad - output_dim), (0, k_pad - input_dim))).astype(cdt)
    bp = jnp.pad(bias, (0, n_pad - output_dim)).astype(jnp.float32).reshape(1, n_pad)

    # Sublane alignment of the x tile follows the compute dtype packing.
    m_align = {4: 8, 2: 16, 1: 32}.get(in_item, 8)

    @jax.jit
    def forward(x):
        batch, k_in = x.shape
        if k_in != input_dim:
            raise ValueError(f"expected input_dim={input_dim}, got {k_in}")
        out_dtype = x.dtype
        out_item = jnp.dtype(out_dtype).itemsize

        m_full = _round_up(batch, m_align)
        # M grid stays 1 for any batch up to tm_cap -> W streamed from HBM once.
        tm = m_full if m_full <= tm_cap else 512
        m_pad = _round_up(m_full, tm)
        m_grid = m_pad // tm

        xp = jnp.pad(x, ((0, m_pad - batch), (0, k_pad - k_in))).astype(cdt)

        est = _working_set_bytes(tm, tn, tk, k_grid, in_item, out_item)
        cp_kwargs = {}
        if est > 16 * _MIB:  # v5e scoped default (16 MiB) is the most restrictive
            cp_kwargs["vmem_limit_bytes"] = int(
                min(limit_cap, max(est * 5 // 4, 32 * _MIB)))

        if k_grid == 1:
            yp = pl.pallas_call(
                _linear_kernel_single_k,
                out_shape=jax.ShapeDtypeStruct((m_pad, n_pad), out_dtype),
                grid_spec=pltpu.PrefetchScalarGridSpec(
                    num_scalar_prefetch=0,
                    grid=(m_grid, n_grid),
                    in_specs=[
                        pl.BlockSpec((tm, tk), lambda i, j: (i, 0)),   # x
                        pl.BlockSpec((tn, tk), lambda i, j: (j, 0)),   # W (torch layout)
                        pl.BlockSpec((1, tn), lambda i, j: (0, j)),    # bias slab
                    ],
                    out_specs=pl.BlockSpec((tm, tn), lambda i, j: (i, j)),
                ),
                compiler_params=pltpu.CompilerParams(
                    dimension_semantics=("parallel", "parallel"), **cp_kwargs),
            )(xp, wp, bp)
        else:
            yp = pl.pallas_call(
                _linear_kernel_multi_k,
                out_shape=jax.ShapeDtypeStruct((m_pad, n_pad), out_dtype),
                grid_spec=pltpu.PrefetchScalarGridSpec(
                    num_scalar_prefetch=0,
                    grid=(m_grid, n_grid, k_grid),
                    in_specs=[
                        pl.BlockSpec((tm, tk), lambda i, j, k: (i, k)),
                        pl.BlockSpec((tn, tk), lambda i, j, k: (j, k)),
                        pl.BlockSpec((1, tn), lambda i, j, k: (0, j)),
                    ],
                    out_specs=pl.BlockSpec((tm, tn), lambda i, j, k: (i, j)),
                    scratch_shapes=[pltpu.VMEM((tm, tn), jnp.float32)],
                ),
                compiler_params=pltpu.CompilerParams(
                    dimension_semantics=("parallel", "parallel", "arbitrary"),
                    **cp_kwargs),
            )(xp, wp, bp)

        return yp[:batch, :output_dim]

    return forward


if __name__ == "__main__":
    key = jax.random.PRNGKey(0)

    # ---- Test 1: small shape implied by the module (single tile, K grid = 1) ----
    input_dim, output_dim, batch = 32, 16, 8
    kx, kw, kb = jax.random.split(key, 3)
    bound = 1.0 / (input_dim ** 0.5)
    weight = jax.random.uniform(kw, (output_dim, input_dim), jnp.float32, -bound, bound)
    bias = jax.random.uniform(kb, (output_dim,), jnp.float32, -bound, bound)
    x = jax.random.normal(kx, (batch, input_dim), jnp.float32)

    fwd = make_linear(weight, bias)
    y = fwd(x)
    jax.block_until_ready(y)
    y_ref = x @ weight.T + bias
    assert y.shape == (batch, output_dim)
    assert jnp.allclose(y, y_ref, atol=1e-4, rtol=1e-4)

    # ---- Test 2: unaligned multi-tile shape; K collapsed to one grid step,
    #      M grid = 1 (W streamed once), N grid = 2 (both v7x TCs get work) ----
    b2, k2, n2 = 300, 384, 200
    kx2, kw2, kb2 = jax.random.split(jax.random.PRNGKey(1), 3)
    bound2 = 1.0 / (k2 ** 0.5)
    w2 = jax.random.uniform(kw2, (n2, k2), jnp.float32, -bound2, bound2)
    bb2 = jax.random.uniform(kb2, (n2,), jnp.float32, -bound2, bound2)
    x2 = jax.random.normal(kx2, (b2, k2), jnp.float32)
    y2_ref = x2 @ w2.T + bb2

    y2 = make_linear(w2, bb2)(x2)
    jax.block_until_ready(y2)
    assert y2.shape == (b2, n2)
    assert jnp.allclose(y2, y2_ref, atol=2e-3, rtol=2e-3)

    # ---- Test 3: forced multi-step K reduction (exercises accumulator path) ----
    y2_acc = make_linear(w2, bb2, max_tk=128)(x2)
    jax.block_until_ready(y2_acc)
    assert jnp.allclose(y2_acc, y2_ref, atol=2e-3, rtol=2e-3)

    # ---- Test 4: bf16 weight/activation streaming on the MXU, f32 accumulation ----
    y2_bf16 = make_linear(w2, bb2, compute_dtype=jnp.bfloat16)(x2)
    jax.block_until_ready(y2_bf16)
    assert jnp.allclose(y2_bf16, y2_ref, atol=5e-2, rtol=5e-2)

    print("KERNEL_OK")
</pallas_src>

<mosaic_0001>
module attributes {stable_mosaic.version = 11 : i64} {
  func.func @_linear_kernel_single_k(%arg0: i32, %arg1: i32, %arg2: memref<8x128xf32, #tpu.memory_space<vmem>>, %arg3: memref<128x128xf32, #tpu.memory_space<vmem>>, %arg4: memref<1x128xf32, #tpu.memory_space<vmem>>, %arg5: memref<8x128xf32, #tpu.memory_space<vmem>>) attributes {dimension_semantics = [#tpu.dimension_semantics<parallel>, #tpu.dimension_semantics<parallel>], iteration_bounds = array<i64: 1, 1>, scalar_prefetch = 0 : i64, scratch_operands = 0 : i64, tpu.core_type = #tpu.core_type<tc>, window_params = [{transform_indices = @transform_0, window_bounds = array<i64: 8, 128>}, {transform_indices = @transform_1, window_bounds = array<i64: 128, 128>}, {transform_indices = @transform_2, window_bounds = array<i64: 1, 128>}, {transform_indices = @transform_3, window_bounds = array<i64: 8, 128>}]} {
    %c0 = arith.constant 0 : index
    %c0_0 = arith.constant 0 : index
    %0 = vector.load %arg2[%c0, %c0_0] : memref<8x128xf32, #tpu.memory_space<vmem>>, vector<8x128xf32>
    %c0_1 = arith.constant 0 : index
    %c0_2 = arith.constant 0 : index
    %1 = vector.load %arg3[%c0_1, %c0_2] : memref<128x128xf32, #tpu.memory_space<vmem>>, vector<128x128xf32>
    %cst = arith.constant dense<0.000000e+00> : vector<8x128xf32>
    %2 = tpu.matmul %0, %1, %cst {dimension_numbers = #tpu.dot_dimension_numbers<[1], [1], [0], [0], [0, 0, 1, 0], [], []>} : vector<8x128xf32>, vector<128x128xf32>, vector<8x128xf32> -> vector<8x128xf32>
    %c0_3 = arith.constant 0 : index
    %c0_4 = arith.constant 0 : index
    %3 = vector.load %arg4[%c0_3, %c0_4] : memref<1x128xf32, #tpu.memory_space<vmem>>, vector<1x128xf32>
    %4 = vector.broadcast %3 : vector<1x128xf32> to vector<8x128xf32>
    %5 = arith.addf %2, %4 : vector<8x128xf32>
    %c0_5 = arith.constant 0 : index
    %c0_6 = arith.constant 0 : index
    %6 = vector.load %arg5[%c0_5, %c0_6] : memref<8x128xf32, #tpu.memory_space<vmem>>, vector<8x128xf32>
    tpu.vector_store %arg5[%c0_5, %c0_6], %5 {strides = array<i32>} : memref<8x128xf32, #tpu.memory_space<vmem>>, vector<8x128xf32>,
    return
  }
  func.func @transform_0(%arg0: i32, %arg1: i32) -> (i32, i32) {
    %c0_i32 = arith.constant 0 : i32
    %c0_i32_0 = arith.constant 0 : i32
    return %arg0, %c0_i32 : i32, i32
  }
  func.func @transform_1(%arg0: i32, %arg1: i32) -> (i32, i32) {
    %c0_i32 = arith.constant 0 : i32
    %c0_i32_0 = arith.constant 0 : i32
    return %arg1, %c0_i32 : i32, i32
  }
  func.func @transform_2(%arg0: i32, %arg1: i32) -> (i32, i32) {
    %c0_i32 = arith.constant 0 : i32
    %c0_i32_0 = arith.constant 0 : i32
    return %c0_i32, %arg1 : i32, i32
  }
  func.func @transform_3(%arg0: i32, %arg1: i32) -> (i32, i32) {
    %c0_i32 = arith.constant 0 : i32
    return %arg0, %arg1 : i32, i32
  }
}

</mosaic_0001>

<llo_original>
// kernel: forward.1
$region0: #{forward.1}
  #allocation0 [shape = 'u32[]', space=smem, size = 0x4, offset = 0x4, fixed_abs, tag = 'smem constant byte address 0x4 - core index']
  #allocation1 [shape = 'u32[72,128]{1,0:T(1,128)}', space=vmem, size = 0x9000, scoped, tag = 'internal scratch']
  %s0 = inlined_call_operand.vmem [shape: f32[8,128], index: 0, kind: input, shape index: {}]
  %s1 = inlined_call_operand.hbm [shape: f32[128,128], index: 1, kind: input, shape index: {}]
  %s2 = inlined_call_operand.vmem [shape: f32[1,128], index: 2, kind: input, shape index: {}]
  %s3 = inlined_call_operand.hbm [shape: f32[8,128], index: 3, kind: output, shape index: {}]
  %s4 = sld [smem:[#allocation0]]
  $region26: #{forward.1} parent=0
    _
  %s6 = ssub.s32 1, %s4
  %s7 = scalar_select 0, %s6, %s4
  $region1: #{forward.1} parent=0
    #allocation2 [shape = 'u8[65536]{0}', space=vmem, size = 0x10000, scoped, tag = 'input window, operand 1, single buffered']
    #allocation3 [shape = 's32[1]{0}', space=sflag, size = 0x4, scoped, tag = 'scoped memory for forward.1']
    #allocation4 [shape = 's32[1]{0}', space=sflag, size = 0x4, scoped, tag = 'scoped memory for forward.1']
    #allocation5 [shape = 'u8[4096]{0}', space=vmem, size = 0x1000, scoped, tag = 'output window, operand 0, single buffered']
    %8 = vsyncpa [#allocation3], 0
    %9 = vsyncpa [#allocation4], 0
    // Predicated region
    $region2: #{forward.1} parent=1 // pred_check
      _
    $region3: #{forward.1} parent=1 // pred_check_branch
      %11 = sbr.rel (0) target = $region5
    $region4: #{forward.1} parent=1 // pred_region
      _
    $region5: #{forward.1} parent=1 // pred_fallthru
      _
    // Predicated region
    $region6: #{forward.1} parent=1 // pred_check
      _
    $region7: #{forward.1} parent=1 // pred_check_branch
      %13 = sbr.rel (0) target = $region9
    $region8: #{forward.1} parent=1 // pred_region
      %15 = vsyncadd [#allocation3], 0
      %s16 = sshll.u32 %s1, 4
      %s17 = int_to_ptr.hbm [resolvable:$true] %s16
      %s18 = sshll.u32 [#allocation2], 4
      %s19 = int_to_ptr.vmem [resolvable:$true] %s18
      %24 = dma.hbm_to_vmem [thread:$0]  %s17, 2048, %s19, [#allocation3], 128, 128, 8
    $region9: #{forward.1} parent=1 // pred_fallthru
      _
    // Predicated region
    $region10: #{forward.1} parent=1 // pred_check
      _
    $region11: #{forward.1} parent=1 // pred_check_branch
      %26 = sbr.rel (0) target = $region13
    $region12: #{forward.1} parent=1 // pred_region
      _
    $region13: #{forward.1} parent=1 // pred_fallthru
      _
    // Predicated region
    $region14: #{forward.1} parent=1 // pred_check
      _
    $region15: #{forward.1} parent=1 // pred_check_branch
      %28 = sbr.rel (0) target = $region17
    $region16: #{forward.1} parent=1 // pred_region
      %30 = dma.done [#allocation3], 2048
    $region17: #{forward.1} parent=1 // pred_fallthru
      _
    %v31 = vld [vmem:[%s0] sm:$0xff]
    %v32 = vld [vmem:[#allocation2] sm:$0xff]
    %v33 = vld [vmem:[#allocation2 + $0x8] sm:$0xff]
    %v34 = vld [vmem:[#allocation2 + $0x10] sm:$0xff]
    %v35 = vld [vmem:[#allocation2 + $0x18] sm:$0xff]
    %v36 = vld [vmem:[#allocation2 + $0x20] sm:$0xff]
    %v37 = vld [vmem:[#allocation2 + $0x28] sm:$0xff]
    %v38 = vld [vmem:[#allocation2 + $0x30] sm:$0xff]
    %v39 = vld [vmem:[#allocation2 + $0x38] sm:$0xff]
    %v40 = vld [vmem:[#allocation2 + $0x40] sm:$0xff]
    %v41 = vld [vmem:[#allocation2 + $0x48] sm:$0xff]
    %v42 = vld [vmem:[#allocation2 + $0x50] sm:$0xff]
    %v43 = vld [vmem:[#allocation2 + $0x58] sm:$0xff]
    %v44 = vld [vmem:[#allocation2 + $0x60] sm:$0xff]
    %v45 = vld [vmem:[#allocation2 + $0x68] sm:$0xff]
    %v46 = vld [vmem:[#allocation2 + $0x70] sm:$0xff]
    %v47 = vld [vmem:[#allocation2 + $0x78] sm:$0xff]
    %v48 = vld [vmem:[%s2] sm:$0x1]
    %v50 = vperm.slane %v48, 0
    %52 = vmatpush.xpose.msra.mxu0 %v47
    %53 = vmatpush.xpose.msra.mxu0 %v46
    %54 = vmatpush.xpose.msra.mxu0 %v45
    %55 = vmatpush.xpose.msra.mxu0 %v44
    %56 = vmatpush.xpose.msra.mxu0 %v43
    %57 = vmatpush.xpose.msra.mxu0 %v42
    %58 = vmatpush.xpose.msra.mxu0 %v41
    %59 = vmatpush.xpose.msra.mxu0 %v40
    %60 = vmatpush.xpose.msra.mxu0 %v39
    %61 = vmatpush.xpose.msra.mxu0 %v38
    %62 = vmatpush.xpose.msra.mxu0 %v37
    %63 = vmatpush.xpose.msra.mxu0 %v36
    %64 = vmatpush.xpose.msra.mxu0 %v35
    %65 = vmatpush.xpose.msra.mxu0 %v34
    %66 = vmatpush.xpose.msra.mxu0 %v33
    %67 = vmatpush.xpose.msra.mxu0 %v32
    %68 = vmatmul.f32.gmra.mxu0 %v31
    %v69 = vpop.f32.mrf.mxu0
    %v70 = vadd.f32 %v50, %v69
    %71 = vdwg.mxu0
    %72 = vst [vmem:[#allocation5] sm:$0xff] %v70
    // Predicated region
    $region18: #{forward.1} parent=1 // pred_check
      _
    $region19: #{forward.1} parent=1 // pred_check_branch
      %74 = sbr.rel (0) target = $region21
    $region20: #{forward.1} parent=1 // pred_region
      %76 = vsyncadd [#allocation4], 0
      %s78 = sshll.u32 [#allocation5], 4
      %s79 = int_to_ptr.vmem [resolvable:$true] %s78
      %s80 = sshll.u32 %s3, 4
      %s81 = int_to_ptr.hbm [resolvable:$true] %s80
      %83 = dma.vmem_to_hbm [thread:$0]  %s79, 128, %s81, [#allocation4]
    $region21: #{forward.1} parent=1 // pred_fallthru
      _
    // Predicated region
    $region22: #{forward.1} parent=1 // pred_check
      _
    $region23: #{forward.1} parent=1 // pred_check_branch
      %85 = sbr.rel (0) target = $region25
    $region24: #{forward.1} parent=1 // pred_region
      %87 = dma.done [#allocation4], 128
    $region25: #{forward.1} parent=1 // pred_fallthru
      _
    %88 = vsyncpa [#allocation3], 1
    %89 = vsyncpa [#allocation4], 1

</llo_original>
